<compile_context>
chip_gen: v7x
topology: tpu7x:2x2x1
jax: 0.10.0
libtpu: 0.0.40
codegen_flags: <defaults>
</compile_context>

<pallas_src>
import functools
import math

import jax
import jax.numpy as jnp
from jax.experimental import pallas as pl
from jax.experimental.pallas import tpu as pltpu


def _rope_kernel(cos_ref, sin_ref, x_ref, o_ref, *, head_dim, rep):
    """cos_ref/sin_ref: (tt, W) f32; x_ref/o_ref: (tt, C) with C = rep * W."""
    x = x_ref[...].astype(jnp.float32)
    rows, width = x.shape
    half = head_dim // 2

    cos = cos_ref[...]
    sin_signed = sin_ref[...]
    if rep > 1:
        # Lane-tile the (tt, W) table to (tt, C).  W is a multiple of 128, so
        # this is 128-aligned replication (cheap vreg copies, no relayout).
        cos = jnp.concatenate([cos] * rep, axis=-1)
        sin_signed = jnp.concatenate([sin_signed] * rep, axis=-1)

    # Partner element within each head, sign folded into the sin table:
    #   out[i] = x[i]*cos[i] + x[i+half]*(-sin[i])   for i % D <  half
    #   out[i] = x[i]*cos[i] + x[i-half]*(+sin[i])   for i % D >= half
    # pltpu.roll matches jnp.roll:  roll(x, s)[i] == x[(i - s) mod width].
    # Neither branch crosses a head boundary, so no wrap correction is needed.
    lane = jax.lax.broadcasted_iota(jnp.int32, (rows, width), 1)
    first_half = (lane % head_dim) < half
    partner = jnp.where(first_half,
                        pltpu.roll(x, width - half, axis=1),   # [i] = x[i + half]
                        pltpu.roll(x, half, axis=1))           # [i] = x[i - half]

    o_ref[...] = (x * cos + partner * sin_signed).astype(o_ref.dtype)


def _vmem_capacity_bytes(default=64 * 1024 * 1024):
    try:
        return int(pltpu.get_tpu_info().vmem_capacity_bytes)
    except Exception:
        return default


class RotaryEmbedding:
    """JAX/Pallas port of the PyTorch RotaryEmbedding module."""

    def __init__(self, dim: int, max_seq_len: int = 8000, base: int = 10000):
        assert dim % 2 == 0
        exps = -jnp.arange(0, dim, 2, dtype=jnp.float32) / dim
        thetas = jnp.asarray(float(base), jnp.float32) ** exps        # (dim/2,)
        t = jnp.arange(0, max_seq_len, dtype=jnp.float32)             # (S,)
        ticks = jnp.outer(t, thetas)                                  # (S, dim/2)
        ticks = jnp.tile(ticks, (1, 2))                               # (S, dim)
        half = dim // 2
        sin = jnp.sin(ticks)
        self.cos = jnp.cos(ticks)                                     # (S, dim) f32
        self.sin = sin                                                # for the reference
        # Sign of the neg_half() term folded into the table:
        #   neg_half(x) * sin == partner(x) * sin_signed
        self.sin_signed = jnp.concatenate([-sin[:, :half], sin[:, half:]], axis=-1)
        self.dim = dim
        self.max_seq_len = max_seq_len

    def __call__(self, x: jnp.ndarray, offset: int = 0, block_rows: int | None = None):
        B, T, H, D = x.shape
        assert D == self.dim
        if isinstance(offset, int):
            assert 0 <= offset and offset + T <= self.max_seq_len, "offset+T out of range"
        # TODO(synk): a traced `offset` bypasses the range check above and
        # dynamic_slice silently clamps out-of-range values.
        C = H * D

        # Active table window, kept f32 for rotation accuracy.
        cos = jax.lax.dynamic_slice_in_dim(self.cos, offset, T, axis=0)         # (T, D)
        sin = jax.lax.dynamic_slice_in_dim(self.sin_signed, offset, T, axis=0)  # (T, D)

        # Table lane width W: a multiple of D that is 128-aligned and divides C
        # when possible (kernel replicates W -> C with clean vreg copies);
        # fallback W = C (fully tiled in the wrapper) for odd head sizes.
        m = (D * 128) // math.gcd(D, 128)          # lcm(D, 128)
        W = m if (m <= C and C % m == 0) else C
        if W > D:
            cos = jnp.tile(cos, (1, W // D))       # cheap: at most (T, W) f32
            sin = jnp.tile(sin, (1, W // D))
        rep = C // W

        x_flat = x.reshape(B, T, C)                # free reshape; lane-dense trailing axis

        # Generation-aware row tile.
        itemsize = x.dtype.itemsize
        sub = max(8, 32 // itemsize)               # 8 f32, 16 bf16, 32 int8/fp8
        if _vmem_capacity_bytes() >= 96 * 1024 * 1024:     # v5e / v6e (128 MiB VMEM)
            budget, vmem_limit = 32 * 1024 * 1024, 64 * 1024 * 1024
        else:                                              # v7x-class (64 MiB VMEM)
            budget, vmem_limit = 16 * 1024 * 1024, 32 * 1024 * 1024

        # Per-row footprint: double-buffered x/out blocks + double-buffered
        # f32 tables + headroom for the in-kernel f32 temporaries.
        per_row = 4 * C * itemsize + 4 * W * 4 + 6 * C * 4
        rows = budget // per_row
        rows = min(1024, max(sub, (rows // sub) * sub))
        if block_rows is not None:
            assert block_rows >= T or block_rows % sub == 0
            rows = block_rows
        tt = T if T <= rows else rows
        grid_t = pl.cdiv(T, tt)
        # Keep >= 2 grid steps when the problem allows it so both v7x
        # TensorCores get a "parallel" step (negligible cost elsewhere).
        if grid_t * B < 2 and T > sub:
            tt = min(tt, ((pl.cdiv(T, 2) + sub - 1) // sub) * sub)
            grid_t = pl.cdiv(T, tt)

        out_flat = pl.pallas_call(
            functools.partial(_rope_kernel, head_dim=D, rep=rep),
            out_shape=jax.ShapeDtypeStruct((B, T, C), x.dtype),
            grid_spec=pltpu.PrefetchScalarGridSpec(
                num_scalar_prefetch=0,
                grid=(grid_t, B),                  # B innermost: table blocks reused
                in_specs=[
                    pl.BlockSpec((tt, W), lambda t, b: (t, 0)),            # cos (f32)
                    pl.BlockSpec((tt, W), lambda t, b: (t, 0)),            # sin_signed (f32)
                    pl.BlockSpec((None, tt, C), lambda t, b: (b, t, 0)),   # x
                ],
                out_specs=pl.BlockSpec((None, tt, C), lambda t, b: (b, t, 0)),
            ),
            compiler_params=pltpu.CompilerParams(
                dimension_semantics=("parallel", "parallel"),
                vmem_limit_bytes=vmem_limit,
            ),
        )(cos, sin, x_flat)
        return out_flat.reshape(B, T, H, D)


def _rope_reference(x, cos_full, sin_full, offset=0):
    B, T, H, D = x.shape
    cos = cos_full[offset:offset + T][None, :, None, :]
    sin = sin_full[offset:offset + T][None, :, None, :]
    x1, x2 = x[..., : D // 2], x[..., D // 2:]
    neg_half = jnp.concatenate([-x2, x1], axis=-1)
    return x * cos + neg_half * sin


if __name__ == "__main__":
    # Test 1: module-consistent small shapes (B, T, H, D) = (2, 8, 4, 32).
    B, T, H, D = 2, 8, 4, 32
    offset = 3
    x = jax.random.normal(jax.random.PRNGKey(0), (B, T, H, D), dtype=jnp.float32)
    rope = RotaryEmbedding(dim=D, max_seq_len=64)
    out = jax.block_until_ready(rope(x, offset=offset))
    ref = _rope_reference(x, rope.cos, rope.sin, offset=offset)
    assert out.shape == (B, T, H, D)
    assert jnp.allclose(out, ref, atol=1e-5, rtol=1e-5), "mismatch vs reference (test 1)"

    # Test 2: exercises the T-tiling path (grid_t > 1) with a different head shape.
    B2, T2, H2, D2 = 1, 48, 2, 64
    x2 = jax.random.normal(jax.random.PRNGKey(0), (B2, T2, H2, D2), dtype=jnp.float32)
    rope2 = RotaryEmbedding(dim=D2, max_seq_len=128)
    out2 = jax.block_until_ready(rope2(x2, offset=5, block_rows=16))
    ref2 = _rope_reference(x2, rope2.cos, rope2.sin, offset=5)
    assert jnp.allclose(out2, ref2, atol=1e-5, rtol=1e-5), "mismatch vs reference (test 2)"

    # Test 3: bf16 input + in-kernel table replication (rep > 1; D = 128, H = 2).
    B3, T3, H3, D3 = 2, 16, 2, 128
    x3 = jax.random.normal(jax.random.PRNGKey(0), (B3, T3, H3, D3), jnp.float32).astype(jnp.bfloat16)
    rope3 = RotaryEmbedding(dim=D3, max_seq_len=32)
    out3 = jax.block_until_ready(rope3(x3, offset=2))
    ref3 = _rope_reference(x3.astype(jnp.float32), rope3.cos, rope3.sin, offset=2)
    assert jnp.allclose(out3.astype(jnp.float32), ref3, atol=3e-2, rtol=3e-2), \
        "mismatch vs reference (test 3)"

    print("KERNEL_OK")
</pallas_src>

<mosaic_0001>
module attributes {stable_mosaic.version = 11 : i64} {
  func.func @_rope_kernel(%arg0: i32, %arg1: i32, %arg2: memref<8x128xf32, #tpu.memory_space<vmem>>, %arg3: memref<8x128xf32, #tpu.memory_space<vmem>>, %arg4: memref<1x8x128xf32, #tpu.memory_space<vmem>>, %arg5: memref<1x8x128xf32, #tpu.memory_space<vmem>>) attributes {dimension_semantics = [#tpu.dimension_semantics<parallel>, #tpu.dimension_semantics<parallel>], iteration_bounds = array<i64: 1, 2>, scalar_prefetch = 0 : i64, scratch_operands = 0 : i64, tpu.core_type = #tpu.core_type<tc>, window_params = [{transform_indices = @transform_0, window_bounds = array<i64: 8, 128>}, {transform_indices = @transform_1, window_bounds = array<i64: 8, 128>}, {transform_indices = @transform_2, window_bounds = array<i64: 1, 8, 128>}, {transform_indices = @transform_3, window_bounds = array<i64: 1, 8, 128>}]} {
    %c0 = arith.constant 0 : index
    %c0_0 = arith.constant 0 : index
    %c0_1 = arith.constant 0 : index
    %0 = vector.load %arg4[%c0, %c0_0, %c0_1] : memref<1x8x128xf32, #tpu.memory_space<vmem>>, vector<1x8x128xf32>
    %1 = vector.shape_cast %0 : vector<1x8x128xf32> to vector<8x128xf32>
    %c0_2 = arith.constant 0 : index
    %c0_3 = arith.constant 0 : index
    %2 = vector.load %arg2[%c0_2, %c0_3] : memref<8x128xf32, #tpu.memory_space<vmem>>, vector<8x128xf32>
    %c0_4 = arith.constant 0 : index
    %c0_5 = arith.constant 0 : index
    %3 = vector.load %arg3[%c0_4, %c0_5] : memref<8x128xf32, #tpu.memory_space<vmem>>, vector<8x128xf32>
    %4 = tpu.iota {dimensions = array<i32: 1>} : vector<8x128xi32>
    %c32_i32 = arith.constant 32 : i32
    %c0_i32 = arith.constant 0 : i32
    %5 = arith.cmpi eq, %c32_i32, %c0_i32 : i32
    %c1_i32 = arith.constant 1 : i32
    %6 = arith.select %5, %c1_i32, %c32_i32 : i32
    %7 = vector.broadcast %6 : i32 to vector<8x128xi32>
    %8 = arith.remsi %4, %7 : vector<8x128xi32>
    %c0_i32_6 = arith.constant 0 : i32
    %9 = vector.broadcast %c0_i32_6 : i32 to vector<8x128xi32>
    %10 = arith.cmpi ne, %8, %9 : vector<8x128xi32>
    %c0_i32_7 = arith.constant 0 : i32
    %11 = vector.broadcast %c0_i32_7 : i32 to vector<8x128xi32>
    %12 = arith.cmpi slt, %8, %11 : vector<8x128xi32>
    %c0_i32_8 = arith.constant 0 : i32
    %13 = arith.cmpi slt, %6, %c0_i32_8 : i32
    %14 = vector.broadcast %13 : i1 to vector<8x128xi1>
    %15 = vector.broadcast %14 : vector<8x128xi1> to vector<8x128xi1>
    %16 = arith.xori %12, %15 : vector<8x128xi1>
    %17 = arith.andi %16, %10 : vector<8x128xi1>
    %18 = vector.broadcast %6 : i32 to vector<8x128xi32>
    %19 = arith.addi %8, %18 : vector<8x128xi32>
    %20 = arith.select %17, %19, %8 : vector<8x128xi1>, vector<8x128xi32>
    %c16_i32 = arith.constant 16 : i32
    %21 = vector.broadcast %c16_i32 : i32 to vector<8x128xi32>
    %22 = arith.cmpi slt, %20, %21 : vector<8x128xi32>
    %c112_i32 = arith.constant 112 : i32
    %23 = tpu.dynamic_rotate %1 by %c112_i32 dim 1 : vector<8x128xf32>, i32 -> vector<8x128xf32>
    %c16_i32_9 = arith.constant 16 : i32
    %24 = tpu.dynamic_rotate %1 by %c16_i32_9 dim 1 : vector<8x128xf32>, i32 -> vector<8x128xf32>
    %25 = arith.select %22, %23, %24 : vector<8x128xi1>, vector<8x128xf32>
    %26 = arith.mulf %1, %2 : vector<8x128xf32>
    %27 = arith.mulf %25, %3 : vector<8x128xf32>
    %28 = arith.addf %26, %27 : vector<8x128xf32>
    %c0_10 = arith.constant 0 : index
    %c0_11 = arith.constant 0 : index
    %c0_12 = arith.constant 0 : index
    %29 = vector.load %arg5[%c0_10, %c0_11, %c0_12] : memref<1x8x128xf32, #tpu.memory_space<vmem>>, vector<1x8x128xf32>
    %30 = vector.shape_cast %29 : vector<1x8x128xf32> to vector<8x128xf32>
    %31 = vector.shape_cast %28 : vector<8x128xf32> to vector<1x8x128xf32>
    tpu.vector_store %arg5[%c0_10, %c0_11, %c0_12], %31 {strides = array<i32>} : memref<1x8x128xf32, #tpu.memory_space<vmem>>, vector<1x8x128xf32>,
    return
  }
  func.func @transform_0(%arg0: i32, %arg1: i32) -> (i32, i32) {
    %c0_i32 = arith.constant 0 : i32
    %c0_i32_0 = arith.constant 0 : i32
    return %arg0, %c0_i32 : i32, i32
  }
  func.func @transform_1(%arg0: i32, %arg1: i32) -> (i32, i32) {
    %c0_i32 = arith.constant 0 : i32
    %c0_i32_0 = arith.constant 0 : i32
    return %arg0, %c0_i32 : i32, i32
  }
  func.func @transform_2(%arg0: i32, %arg1: i32) -> (i32, i32, i32) {
    %c0_i32 = arith.constant 0 : i32
    %c0_i32_0 = arith.constant 0 : i32
    return %arg1, %arg0, %c0_i32 : i32, i32, i32
  }
  func.func @transform_3(%arg0: i32, %arg1: i32) -> (i32, i32, i32) {
    %c0_i32 = arith.constant 0 : i32
    %c0_i32_0 = arith.constant 0 : i32
    return %arg1, %arg0, %c0_i32 : i32, i32, i32
  }
}

</mosaic_0001>

<llo_original>
// kernel: tpu_custom_call.1
$region0: #{tpu_custom_call.1}
  #allocation0 [shape = 'u32[]', space=smem, size = 0x4, offset = 0x4, fixed_abs, tag = 'smem constant byte address 0x4 - core index']
  #allocation1 [shape = 'u32[144,128]{1,0:T(1,128)}', space=vmem, size = 0x12000, scoped, tag = 'internal scratch']
  %s0 = inlined_call_operand.hbm [shape: f32[8,128], index: 0, kind: input, shape index: {}]
  %s1 = inlined_call_operand.hbm [shape: f32[8,128], index: 1, kind: input, shape index: {}]
  %s2 = inlined_call_operand.hbm [shape: f32[2,8,128], index: 2, kind: input, shape index: {}]
  %s3 = inlined_call_operand.hbm [shape: f32[2,8,128], index: 3, kind: output, shape index: {}]
  %s4 = sld [smem:[#allocation0]]
  $region57: #{tpu_custom_call.1} parent=0
    _
  %s6 = ssub.s32 1, %s4
  %s7 = scalar_select 0, %s6, %s4
  $region1: #{tpu_custom_call.1} parent=0
    #allocation2 [shape = 'u8[4096]{0}', space=vmem, size = 0x1000, scoped, tag = 'input window, operand 0, single buffered']
    #allocation3 [shape = 's32[2]{0}', space=sflag, size = 0x8, scoped, tag = 'scoped memory for tpu_custom_call.1']
    #allocation4 [shape = 's32[2]{0}', space=sflag, size = 0x8, scoped, tag = 'scoped memory for tpu_custom_call.1']
    #allocation5 [shape = 'u8[4096]{0}', space=vmem, size = 0x1000, scoped, tag = 'input window, operand 1, single buffered']
    #allocation6 [shape = 's32[1]{0}', space=sflag, size = 0x4, scoped, tag = 'scoped memory for tpu_custom_call.1']
    #allocation7 [shape = 'u8[8192]{0}', space=vmem, size = 0x2000, scoped, tag = 'input window, operand 2']
    #allocation8 [shape = 'u8[8192]{0}', space=vmem, size = 0x2000, scoped, tag = 'output window, operand 0']
    %8 = vsyncpa [#allocation3], 0
    %9 = vsyncpa [#allocation6], 0
    %10 = vsyncpa [#allocation4], 0
    %s11 = scalar_lea.sflag [#allocation4], 1
    %12 = vsyncpa %s11, 0
    loop: start=0, step=1, limit=4
    $region2: #{tpu_custom_call.1} parent=1 // loop_pre_header
      _
    $region3: #{tpu_custom_call.1} parent=1 // loop_header
      %s14 = sphi 0, %s18
      %p15 = scmp.ge.s32.totalorder %s14, 4
      %s21 = sphi 0, %s33
      %s22 = sphi 0, %s29
      %s23 = sphi 0, %s21
      %s24 = sphi 0, %s22
      %s25 = sphi 0, %s23
      %s26 = sphi 0, %s24
      %s36 = sphi 0, %s38
      %s39 = sphi 0, %s36
      %s40 = sphi 0, %s39
      %s56 = sphi 0, %s40
      %s62 = sphi 0, %s64
      %s65 = sphi 0, %s62
      %s66 = sphi 0, %s65
      %s82 = sphi 0, %s66
      %s90 = sphi 0, %s92
      %s93 = sphi 0, %s90
      %s94 = sphi 0, %s93
      %s110 = sphi 0, %s94
      %s118 = sphi 0, %s120
      %s121 = sphi 0, %s118
      %s122 = sphi 0, %s121
      %s138 = sphi 0, %s122
    $region4: #{tpu_custom_call.1} parent=1 // loop_header_branch
      %17 = sbr.rel (%p15) target = $region8
    $region5: #{tpu_custom_call.1} parent=1 // loop_body
      %s19 = ssub.s32 %s14, 1
      %s20 = ssub.s32 %s14, 2
      %s27 = sadd.s32 1, %s22
      %p28 = scmp.ge.s32.totalorder %s27, 2
      %s29 = scalar_select %p28, 0, %s27
      %s30 = sadd.s32 1, %s21
      %s31 = scalar_select %p28, %s30, %s21
      %p32 = scmp.ge.s32.totalorder %s31, 1
      %s33 = scalar_select %p32, 0, %s31
      %s34 = ssub.s32 %s21, %s33
      %p35 = scmp.eq.s32.totalorder %s34, 0
      %s37 = sadd.s32 %s36, 1
      %s38 = scalar_select %p35, %s36, %s37
      %p41 = pneg %p35
      %p42 = scmp.eq.s32.totalorder %s14, 1
      %p43 = por %p41, %p42
      %p44 = scmp.ne.s32.totalorder %s36, %s39
      %p45 = scmp.eq.s32.totalorder %s14, 0
      %p46 = por %p44, %p45
      %p47 = scmp.ne.s32.totalorder %s36, %s39
      %p48 = scmp.eq.s32.totalorder %s19, 1
      %p49 = por %p47, %p48
      %p50 = scmp.ne.s32.totalorder %s39, %s40
      %p51 = scmp.eq.s32.totalorder %s19, 0
      %p52 = por %p50, %p51
      %p53 = scmp.ne.s32.totalorder %s39, %s40
      %p54 = scmp.eq.s32.totalorder %s20, 1
      %p55 = por %p53, %p54
      %p57 = scmp.ne.s32.totalorder %s40, %s56
      %p58 = scmp.eq.s32.totalorder %s20, 0
      %p59 = por %p57, %p58
      %s60 = ssub.s32 %s21, %s33
      %p61 = scmp.eq.s32.totalorder %s60, 0
      %s63 = sadd.s32 %s62, 1
      %s64 = scalar_select %p61, %s62, %s63
      %p67 = pneg %p61
      %p68 = scmp.eq.s32.totalorder %s14, 1
      %p69 = por %p67, %p68
      %p70 = scmp.ne.s32.totalorder %s62, %s65
      %p71 = scmp.eq.s32.totalorder %s14, 0
      %p72 = por %p70, %p71
      %p73 = scmp.ne.s32.totalorder %s62, %s65
      %p74 = scmp.eq.s32.totalorder %s19, 1
      %p75 = por %p73, %p74
      %p76 = scmp.ne.s32.totalorder %s65, %s66
      %p77 = scmp.eq.s32.totalorder %s19, 0
      %p78 = por %p76, %p77
      %p79 = scmp.ne.s32.totalorder %s65, %s66
      %p80 = scmp.eq.s32.totalorder %s20, 1
      %p81 = por %p79, %p80
      %p83 = scmp.ne.s32.totalorder %s66, %s82
      %p84 = scmp.eq.s32.totalorder %s20, 0
      %p85 = por %p83, %p84
      %s86 = ssub.s32 %s22, %s29
      %s87 = ssub.s32 %s21, %s33
      %s88 = sor.u32 %s86, %s87
      %p89 = scmp.eq.s32.totalorder %s88, 0
      %s91 = sadd.s32 %s90, 1
      %s92 = scalar_select %p89, %s90, %s91
      %p95 = pneg %p89
      %p96 = scmp.eq.s32.totalorder %s14, 1
      %p97 = por %p95, %p96
      %p98 = scmp.ne.s32.totalorder %s90, %s93
      %p99 = scmp.eq.s32.totalorder %s14, 0
      %p100 = por %p98, %p99
      %p101 = scmp.ne.s32.totalorder %s90, %s93
      %p102 = scmp.eq.s32.totalorder %s19, 1
      %p103 = por %p101, %p102
      %p104 = scmp.ne.s32.totalorder %s93, %s94
      %p105 = scmp.eq.s32.totalorder %s19, 0
      %p106 = por %p104, %p105
      %p107 = scmp.ne.s32.totalorder %s93, %s94
      %p108 = scmp.eq.s32.totalorder %s20, 1
      %p109 = por %p107, %p108
      %p111 = scmp.ne.s32.totalorder %s94, %s110
      %p112 = scmp.eq.s32.totalorder %s20, 0
      %p113 = por %p111, %p112
      %s114 = ssub.s32 %s22, %s29
      %s115 = ssub.s32 %s21, %s33
      %s116 = sor.u32 %s114, %s115
      %p117 = scmp.eq.s32.totalorder %s116, 0
      %s119 = sadd.s32 %s118, 1
      %s120 = scalar_select %p117, %s118, %s119
      %p123 = pneg %p117
      %p124 = scmp.eq.s32.totalorder %s14, 1
      %p125 = por %p123, %p124
      %p126 = scmp.ne.s32.totalorder %s118, %s121
      %p127 = scmp.eq.s32.totalorder %s14, 0
      %p128 = por %p126, %p127
      %p129 = scmp.ne.s32.totalorder %s118, %s121
      %p130 = scmp.eq.s32.totalorder %s19, 1
      %p131 = por %p129, %p130
      %p132 = scmp.ne.s32.totalorder %s121, %s122
      %p133 = scmp.eq.s32.totalorder %s19, 0
      %p134 = por %p132, %p133
      %p135 = scmp.ne.s32.totalorder %s121, %s122
      %p136 = scmp.eq.s32.totalorder %s20, 1
      %p137 = por %p135, %p136
      %p139 = scmp.ne.s32.totalorder %s122, %s138
      %p140 = scmp.eq.s32.totalorder %s20, 0
      %p141 = por %p139, %p140
      %p142 = scmp.le.s32.totalorder 1, %s14
      %p143 = scmp.lt.s32.totalorder %s14, 3
      %p144 = pnand %p142, %p143
      %p145 = pneg %p144
      // Predicated region
      $region9: #{tpu_custom_call.1} parent=5 // pred_check
        _
      $region10: #{tpu_custom_call.1} parent=5 // pred_check_branch
        %147 = sbr.rel (%p144) target = $region12
      $region11: #{tpu_custom_call.1} parent=5 // pred_region
        %s148 = ssub.s32 %s14, 1
        // Predicated region
        $region13: #{tpu_custom_call.1} parent=11 // pred_check
          %p149 = pneg %p52
        $region14: #{tpu_custom_call.1} parent=11 // pred_check_branch
          %151 = sbr.rel (%p149) target = $region16
        $region15: #{tpu_custom_call.1} parent=11 // pred_region
          %s153 = ssub.s32 128, 128
          %154 = vsyncadd [#allocation3], %s153
          %s155 = smul.addr %s23, 128
          %s156 = scalar_lea.hbm %s0, %s155
          %s158 = sshll.u32 [#allocation2], 4
          %s159 = int_to_ptr.vmem [resolvable:$true] %s158
          %161 = dma.hbm_to_vmem [thread:$0]  %s156, 128, %s159, [#allocation3]
        $region16: #{tpu_custom_call.1} parent=11 // pred_fallthru
          _
        // Predicated region
        $region17: #{tpu_custom_call.1} parent=11 // pred_check
          %p162 = pneg %p78
        $region18: #{tpu_custom_call.1} parent=11 // pred_check_branch
          %164 = sbr.rel (%p162) target = $region20
        $region19: #{tpu_custom_call.1} parent=11 // pred_region
          %s166 = ssub.s32 128, 128
          %167 = vsyncadd [#allocation6], %s166
          %s168 = smul.addr %s23, 128
          %s169 = scalar_lea.hbm %s1, %s168
          %s171 = sshll.u32 [#allocation5], 4
          %s172 = int_to_ptr.vmem [resolvable:$true] %s171
          %174 = dma.hbm_to_vmem [thread:$0]  %s169, 128, %s172, [#allocation6]
        $region20: #{tpu_custom_call.1} parent=11 // pred_fallthru
          _
      $region12: #{tpu_custom_call.1} parent=5 // pred_fallthru
        _
      %p175 = scmp.lt.s32.totalorder %s14, 2
      // Predicated region
      $region21: #{tpu_custom_call.1} parent=5 // pred_check
        %p176 = pneg %p175
      $region22: #{tpu_custom_call.1} parent=5 // pred_check_branch
        %178 = sbr.rel (%p176) target = $region24
      $region23: #{tpu_custom_call.1} parent=5 // pred_region
        // Predicated region
        $region25: #{tpu_custom_call.1} parent=23 // pred_check
          %p179 = pneg %p100
        $region26: #{tpu_custom_call.1} parent=23 // pred_check_branch
          %181 = sbr.rel (%p179) target = $region28
        $region27: #{tpu_custom_call.1} parent=23 // pred_region
          %s182 = sand.u32 %s14, 1
          %s183 = scalar_lea.sflag [#allocation3], %s182
          %s184 = sand.u32 %s90, 1
          %s185 = smul.addr %s184, 8
          %s186 = scalar_lea.vmem [#allocation7], %s185
          %s188 = ssub.s32 128, 128
          %189 = vsyncadd %s183, %s188
          %s190 = sadd.s32 %s21, %s22
          %s191 = smul.addr %s190, 128
          %s192 = scalar_lea.hbm %s2, %s191
          %s194 = sshll.u32 %s186, 4
          %s195 = int_to_ptr.vmem [resolvable:$true] %s194
          %197 = dma.hbm_to_vmem [thread:$0]  %s192, 128, %s195, %s183
        $region28: #{tpu_custom_call.1} parent=23 // pred_fallthru
          _
      $region24: #{tpu_custom_call.1} parent=5 // pred_fallthru
        _
      %p198 = scmp.le.s32.totalorder 1, %s14
      %p199 = scmp.lt.s32.totalorder %s14, 3
      %p200 = pnand %p198, %p199
      %p201 = pneg %p200
      // Predicated region
      $region29: #{tpu_custom_call.1} parent=5 // pred_check
        _
      $region30: #{tpu_custom_call.1} parent=5 // pred_check_branch
        %203 = sbr.rel (%p200) target = $region32
      $region31: #{tpu_custom_call.1} parent=5 // pred_region
        %s204 = ssub.s32 %s14, 1
        // Predicated region
        $region33: #{tpu_custom_call.1} parent=31 // pred_check
          %p205 = pneg %p52
        $region34: #{tpu_custom_call.1} parent=31 // pred_check_branch
          %207 = sbr.rel (%p205) target = $region36
        $region35: #{tpu_custom_call.1} parent=31 // pred_region
          %208 = dma.done [#allocation3], 128
        $region36: #{tpu_custom_call.1} parent=31 // pred_fallthru
          _
        // Predicated region
        $region37: #{tpu_custom_call.1} parent=31 // pred_check
          %p209 = pneg %p78
        $region38: #{tpu_custom_call.1} parent=31 // pred_check_branch
          %211 = sbr.rel (%p209) target = $region40
        $region39: #{tpu_custom_call.1} parent=31 // pred_region
          %212 = dma.done [#allocation6], 128
        $region40: #{tpu_custom_call.1} parent=31 // pred_fallthru
          _
        %s213 = sand.u32 %s19, 1
        %s214 = scalar_lea.sflag [#allocation3], %s213
        %s215 = sand.u32 %s93, 1
        %s216 = smul.addr %s215, 8
        %s217 = scalar_lea.vmem [#allocation7], %s216
        // Predicated region
        $region41: #{tpu_custom_call.1} parent=31 // pred_check
          %p218 = pneg %p106
        $region42: #{tpu_custom_call.1} parent=31 // pred_check_branch
          %220 = sbr.rel (%p218) target = $region44
        $region43: #{tpu_custom_call.1} parent=31 // pred_region
          %221 = dma.done %s214, 128
        $region44: #{tpu_custom_call.1} parent=31 // pred_fallthru
          _
        %p222 = pneg %p52
        %p223 = pneg %p49
        %p224 = pneg %p78
        %p225 = pneg %p75
        %s226 = sand.u32 %s19, 1
        %s227 = scalar_lea.sflag [#allocation3], %s226
        %s228 = sand.u32 %s93, 1
        %s229 = smul.addr %s228, 8
        %s230 = scalar_lea.vmem [#allocation7], %s229
        %p231 = pneg %p106
        %p232 = pneg %p103
        %p233 = pneg %p134
        %p234 = pneg %p131
        %s235 = sand.u32 %s121, 1
        %s236 = scalar_lea.sflag [#allocation4], %s235
        %s237 = sand.u32 %s121, 1
        %s238 = smul.addr %s237, 8
        %s239 = scalar_lea.vmem [#allocation8], %s238
        %v240 = vld [vmem:[%s217] sm:$0xff]
        %v241 = vld [vmem:[#allocation2] sm:$0xff]
        %v242 = vld [vmem:[#allocation5] sm:$0xff]
        %v243 = vlaneseq
        %v244 = vand.u32 %v243, 127
        %vm245 = vcmp.lt.s32.totalorder %v244, 0
        %v246 = vsub.s32 0, %v244
        %v247 = vsel %vm245, %v246, %v244
        %v248 = vshrl.u32 %v247, 5
        %v249 = vand.u32 %v247, 31
        %v250 = vsub.s32 0, %v249
        %v251 = vsel %vm245, %v250, %v249
        %vm252 = vcmp.ne.s32.totalorder %v251, 0
        %vm253 = vcmp.lt.s32.totalorder %v251, 0
        %vm254 = vmand %vm253, %vm252
        %v255 = vadd.s32 %v251, 32
        %v256 = vsel %vm254, %v255, %v251
        %vm257 = vcmp.lt.s32.totalorder %v256, 16
        %258 = vrot.lane.b32.xlu0 %v240, 112
        %v259 = vpop.permute.xlu0 %258
        %260 = vrot.lane.b32.xlu0 %v240, 16
        %v261 = vpop.permute.xlu0 %260
        %v262 = vsel %vm257, %v259, %v261
        %v263 = vmul.f32 %v240, %v241
        %v264 = vmul.f32 %v262, %v242
        %v265 = vadd.f32 %v263, %v264
        %266 = vst [vmem:[%s239] sm:$0xff] %v265
        %s267 = sand.u32 %s121, 1
        %s268 = scalar_lea.sflag [#allocation4], %s267
        %s269 = sand.u32 %s121, 1
        %s270 = smul.addr %s269, 8
        %s271 = scalar_lea.vmem [#allocation8], %s270
        // Predicated region
        $region45: #{tpu_custom_call.1} parent=31 // pred_check
          %p272 = pneg %p131
        $region46: #{tpu_custom_call.1} parent=31 // pred_check_branch
          %274 = sbr.rel (%p272) target = $region48
        $region47: #{tpu_custom_call.1} parent=31 // pred_region
          %s276 = ssub.s32 128, 128
          %277 = vsyncadd %s268, %s276
          %s278 = sadd.s32 %s23, %s24
          %s279 = smul.addr %s278, 128
          %s280 = scalar_lea.hbm %s3, %s279
          %s282 = sshll.u32 %s271, 4
          %s283 = int_to_ptr.vmem [resolvable:$true] %s282
          %285 = dma.vmem_to_hbm [thread:$0]  %s283, 128, %s280, %s268
        $region48: #{tpu_custom_call.1} parent=31 // pred_fallthru
          _
      $region32: #{tpu_custom_call.1} parent=5 // pred_fallthru
        _
      %p286 = scmp.le.s32.totalorder 2, %s14
      // Predicated region
      $region49: #{tpu_custom_call.1} parent=5 // pred_check
        %p287 = pneg %p286
      $region50: #{tpu_custom_call.1} parent=5 // pred_check_branch
        %289 = sbr.rel (%p287) target = $region52
      $region51: #{tpu_custom_call.1} parent=5 // pred_region
        %s290 = ssub.s32 %s14, 2
        // Predicated region
        $region53: #{tpu_custom_call.1} parent=51 // pred_check
          %p291 = pneg %p137
        $region54: #{tpu_custom_call.1} parent=51 // pred_check_branch
          %293 = sbr.rel (%p291) target = $region56
        $region55: #{tpu_custom_call.1} parent=51 // pred_region
          %s294 = sand.u32 %s122, 1
          %s295 = scalar_lea.sflag [#allocation4], %s294
          %s296 = sand.u32 %s122, 1
          %s297 = smul.addr %s296, 8
          %s298 = scalar_lea.vmem [#allocation8], %s297
          %299 = dma.done %s295, 128
        $region56: #{tpu_custom_call.1} parent=51 // pred_fallthru
          _
      $region52: #{tpu_custom_call.1} parent=5 // pred_fallthru
        _
    $region6: #{tpu_custom_call.1} parent=1 // loop_footer
      %s18 = sadd.s32 1, %s14
    $region7: #{tpu_custom_call.1} parent=1 // loop_footer_branch
      %13 = sbr.rel target = $region3
    $region8: #{tpu_custom_call.1} parent=1 // loop_exit
      _
    %300 = vsyncpa [#allocation3], 1
    %s301 = scalar_lea.sflag [#allocation3], 1
    %302 = vsyncpa %s301, 1
    %303 = vsyncpa [#allocation6], 1
    %304 = vsyncpa [#allocation4], 1
    %s305 = scalar_lea.sflag [#allocation4], 1
    %306 = vsyncpa %s305, 1

</llo_original>
